<compile_context>
chip_gen: v7x
topology: tpu7x:2x2x1
jax: 0.10.0
libtpu: 0.0.40
codegen_flags: <defaults>
</compile_context>

<pallas_src>
import functools

import jax
import jax.numpy as jnp
from jax.experimental import pallas as pl
from jax.experimental.pallas import tpu as pltpu

LANE = 128


def _round_up(x, m):
    return (x + m - 1) // m * m


# ----------------------------------------------------------------------------
# Kernel 1: backbone for one grid step (images_per_step images).
#   1x1 conv as C VPU broadcast-FMAs -> bias + ReLU -> global average pool.
#   x_ref:    (ips, C, HW) f32      NCHW view, channels tiny (3-4), HW on lanes
#   wct_ref:  (F_pad, C) f32        conv weight, transposed so F sits on sublanes
#   bc_ref:   (F_pad, 1) f32        conv bias
#   feat_ref: (ips, F_pad) f32      pooled features (per-step output block)
# ----------------------------------------------------------------------------
def backbone_kernel(x_ref, wct_ref, bc_ref, feat_ref):
    ips, n_c, hw = x_ref.shape

    x = x_ref[...]          # one load of the whole step block
    wct = wct_ref[...]      # resident weight (constant index_map)
    bias = bc_ref[...]      # read once, hoisted out of the channel loop

    # z[i, f, p] = sum_c wct[f, c] * x[i, c, p]   -- C real FMAs per output element,
    # all on the VPU; no zero-padded K rows, no MXU start/drain per image.
    acc = wct[None, :, 0:1] * x[:, 0:1, :]                      # (ips, F_pad, HW)
    for c in range(1, n_c):                                     # C is tiny & static
        acc = acc + wct[None, :, c:c + 1] * x[:, c:c + 1, :]

    z = jnp.maximum(acc + bias[None, :, :], 0.0)                # bias + ReLU (f32 VPU)
    pooled = jnp.sum(z, axis=-1) * (1.0 / hw)                   # global avg pool -> (ips, F_pad)

    feat_ref[...] = pooled                                      # single aligned lane-dense store


# ----------------------------------------------------------------------------
# Kernel 2: head over the whole batch.
#   Linear(F -> E) on the MXU (f32 accumulation) + BatchNorm1d with batch statistics.
# ----------------------------------------------------------------------------
def head_kernel(f_ref, wl_ref, bl_ref, g_ref, beta_ref, o_ref, *, eps):
    lin = jnp.dot(f_ref[...], wl_ref[...],
                  preferred_element_type=jnp.float32) + bl_ref[...]   # (B, E_pad)
    mu = jnp.mean(lin, axis=0, keepdims=True)                         # batch mean
    var = jnp.mean((lin - mu) * (lin - mu), axis=0, keepdims=True)    # biased variance
    inv = jax.lax.rsqrt(var + eps)
    o_ref[...] = (lin - mu) * inv * g_ref[...] + beta_ref[...]


# ----------------------------------------------------------------------------
# images_per_step from the VMEM budget (not a fixed list).  The output block
# (ips, F_pad) requires ips == B or ips % 8 == 0; ips must divide B.
# ----------------------------------------------------------------------------
def _pick_images_per_step(B, C, HW, F_pad, budget_bytes):
    cands = {B}
    m = 8
    while m < B:
        if B % m == 0:
            cands.add(m)
        m += 8
    for ips in sorted(cands, reverse=True):
        need = (2 * ips * C * HW * 4          # double-buffered input block (f32)
                + ips * F_pad * HW * 4        # z / acc intermediate (f32)
                + 2 * ips * F_pad * 4         # double-buffered output block
                + 2 * (F_pad * C + F_pad) * 4)  # resident conv weight + bias
        if need <= budget_bytes:
            return ips
    return min(cands)


# ----------------------------------------------------------------------------
# Wrapper
# ----------------------------------------------------------------------------
def encoder_cnn_forward(images_nchw, params, *, images_per_step=None,
                        vmem_limit_bytes=None):
    """images_nchw: [B, C, H, W] float32 -> embeddings [B, E] float32."""
    B, C, H, W = images_nchw.shape
    HW = H * W
    F = params["conv_w"].shape[1]
    E = params["lin_w"].shape[1]
    F_pad = _round_up(F, LANE)
    E_pad = _round_up(E, LANE)

    # Per-generation VMEM budget: raise the scoped limit well above the default on
    # 128 MiB parts (v5e/v6e) but stay safely inside v7x's 64 MiB physical VMEM.
    try:
        vmem_cap = pltpu.get_tpu_info().vmem_capacity_bytes
    except Exception:
        vmem_cap = 64 * 1024 * 1024
    if vmem_limit_bytes is None:
        vmem_limit_bytes = int(min(vmem_cap * 3 // 4, 96 * 1024 * 1024))
    if images_per_step is None:
        images_per_step = _pick_images_per_step(B, C, HW, F_pad,
                                                int(vmem_limit_bytes * 0.75))
    assert B % images_per_step == 0
    n_steps = B // images_per_step

    # Free view: NCHW -> (B, C, HW).  No transpose, no channel padding, no dtype cast;
    # the input is read from HBM exactly once, at its true size, by the kernel's DMA.
    x = images_nchw.reshape(B, C, HW)
    # TODO(synk): for real 224x224 ResNet-scale inputs, add an HW tile axis (second
    # grid dim or inner emit_pipeline) and accumulate the pooled sum per HW tile so the
    # (ips, F_pad, HW) intermediate never has to fit VMEM at once.

    # Parameter layout glue (tiny, one-time): only F/E are padded to the 128-lane
    # width; padded rows/cols are zero (gamma padded with 1) so padded outputs are 0.
    wct = jnp.pad(params["conv_w"].T, ((0, F_pad - F), (0, 0))).astype(jnp.float32)
    bc = jnp.pad(params["conv_b"].reshape(F, 1),
                 ((0, F_pad - F), (0, 0))).astype(jnp.float32)
    wl = jnp.pad(params["lin_w"], ((0, F_pad - F), (0, E_pad - E))).astype(jnp.float32)
    bl = jnp.pad(params["lin_b"].reshape(1, E),
                 ((0, 0), (0, E_pad - E))).astype(jnp.float32)
    g = jnp.pad(params["bn_gamma"].reshape(1, E), ((0, 0), (0, E_pad - E)),
                constant_values=1.0).astype(jnp.float32)
    be = jnp.pad(params["bn_beta"].reshape(1, E),
                 ((0, 0), (0, E_pad - E))).astype(jnp.float32)

    # --- Kernel 1: backbone, parallel batch axis (both TensorCores on v7x). ---
    feats = pl.pallas_call(
        backbone_kernel,
        out_shape=jax.ShapeDtypeStruct((B, F_pad), jnp.float32),
        grid=(n_steps,),
        in_specs=[
            pl.BlockSpec((images_per_step, C, HW), lambda s: (s, 0, 0)),
            pl.BlockSpec((F_pad, C), lambda s: (0, 0)),      # weights stay resident
            pl.BlockSpec((F_pad, 1), lambda s: (0, 0)),
        ],
        out_specs=pl.BlockSpec((images_per_step, F_pad), lambda s: (s, 0)),
        compiler_params=pltpu.CompilerParams(
            dimension_semantics=("parallel",),
            vmem_limit_bytes=vmem_limit_bytes,
        ),
    )(x, wct, bc)

    # --- Kernel 2: Linear + BatchNorm1d head over the whole batch. ---
    out_padded = pl.pallas_call(
        functools.partial(head_kernel, eps=1e-5),
        out_shape=jax.ShapeDtypeStruct((B, E_pad), jnp.float32),
        grid=(1,),
        in_specs=[
            pl.BlockSpec((B, F_pad), lambda s: (0, 0)),
            pl.BlockSpec((F_pad, E_pad), lambda s: (0, 0)),
            pl.BlockSpec((1, E_pad), lambda s: (0, 0)),
            pl.BlockSpec((1, E_pad), lambda s: (0, 0)),
            pl.BlockSpec((1, E_pad), lambda s: (0, 0)),
        ],
        out_specs=pl.BlockSpec((B, E_pad), lambda s: (0, 0)),
        compiler_params=pltpu.CompilerParams(
            dimension_semantics=("arbitrary",),
            vmem_limit_bytes=vmem_limit_bytes,
        ),
    )(feats, wl, bl, g, be)

    return out_padded[:, :E]


# Pure-JAX reference mirroring the kernel numerics (all f32).
def encoder_cnn_reference(images_nchw, params):
    B, C, H, W = images_nchw.shape
    x = images_nchw.reshape(B, C, H * W)
    z = jnp.einsum("bcp,cf->bpf", x, params["conv_w"],
                   precision=jax.lax.Precision.HIGHEST)
    z = jnp.maximum(z + params["conv_b"][None, None, :], 0.0)
    feats = jnp.mean(z, axis=1)
    lin = jnp.dot(feats, params["lin_w"],
                  precision=jax.lax.Precision.HIGHEST) + params["lin_b"][None, :]
    mu = jnp.mean(lin, axis=0, keepdims=True)
    var = jnp.mean((lin - mu) ** 2, axis=0, keepdims=True)
    return ((lin - mu) * jax.lax.rsqrt(var + 1e-5) * params["bn_gamma"][None, :]
            + params["bn_beta"][None, :])


def init_params(key, in_channels, feat_dim, embed_size):
    k_conv, k_lin = jax.random.split(key)
    # Stand-in backbone params (deterministic; not a pretrained checkpoint).
    conv_w = 0.1 * jax.random.normal(k_conv, (in_channels, feat_dim), jnp.float32)
    conv_b = jnp.zeros((feat_dim,), jnp.float32)
    # Head params matching EncoderCNN.init_weights(): weight ~ N(0, 0.02), bias = 0.
    lin_w = 0.02 * jax.random.normal(k_lin, (feat_dim, embed_size), jnp.float32)
    lin_b = jnp.zeros((embed_size,), jnp.float32)
    # BatchNorm1d default affine init: gamma = 1, beta = 0 (training-mode batch stats).
    bn_gamma = jnp.ones((embed_size,), jnp.float32)
    bn_beta = jnp.zeros((embed_size,), jnp.float32)
    return dict(conv_w=conv_w, conv_b=conv_b, lin_w=lin_w, lin_b=lin_b,
                bn_gamma=bn_gamma, bn_beta=bn_beta)


if __name__ == "__main__":
    # Small shapes consistent with the forward pass: images [B, C, H, W],
    # stand-in "resnet.fc.in_features" = 32 (2048 in real ResNet-152), embed_size = 32.
    B, C, H, W = 2, 4, 16, 16
    FEAT_DIM = 32
    EMBED = 32

    key = jax.random.PRNGKey(0)
    k_img, k_par = jax.random.split(key)
    images = jax.random.normal(k_img, (B, C, H, W), jnp.float32)
    params = init_params(k_par, C, FEAT_DIM, EMBED)

    out = encoder_cnn_forward(images, params)
    out = jax.block_until_ready(out)

    ref = encoder_cnn_reference(images, params)
    assert out.shape == (B, EMBED)
    assert jnp.max(jnp.abs(out - ref)) < 2e-2, float(jnp.max(jnp.abs(out - ref)))

    # TODO(synk): pretrained ResNet-152 trunk weights cannot be reproduced in-script;
    # a deterministic 1x1-conv + ReLU + global-avg-pool stand-in is used instead.
    # NOTE: BatchNorm1d uses training-mode batch statistics (a torch .eval() model
    # would use running stats); with B=1 batch variance collapses to ~0.
    print("KERNEL_OK")
</pallas_src>

<mosaic_0001>
module attributes {stable_mosaic.version = 11 : i64} {
  func.func @backbone_kernel(%arg0: i32, %arg1: memref<2x4x256xf32, #tpu.memory_space<vmem>>, %arg2: memref<128x4xf32, #tpu.memory_space<vmem>>, %arg3: memref<128x1xf32, #tpu.memory_space<vmem>>, %arg4: memref<2x128xf32, #tpu.memory_space<vmem>>) attributes {dimension_semantics = [#tpu.dimension_semantics<parallel>], iteration_bounds = array<i64: 1>, scalar_prefetch = 0 : i64, scratch_operands = 0 : i64, tpu.core_type = #tpu.core_type<tc>, window_params = [{transform_indices = @transform_0, window_bounds = array<i64: 2, 4, 256>}, {pipeline_mode = #tpu.pipeline_mode<synchronous>, transform_indices = @transform_1, window_bounds = array<i64: 128, 4>}, {pipeline_mode = #tpu.pipeline_mode<synchronous>, transform_indices = @transform_2, window_bounds = array<i64: 128, 1>}, {transform_indices = @transform_3, window_bounds = array<i64: 2, 128>}]} {
    %c0 = arith.constant 0 : index
    %c0_0 = arith.constant 0 : index
    %c0_1 = arith.constant 0 : index
    %0 = vector.load %arg1[%c0, %c0_0, %c0_1] : memref<2x4x256xf32, #tpu.memory_space<vmem>>, vector<2x4x256xf32>
    %c0_2 = arith.constant 0 : index
    %c0_3 = arith.constant 0 : index
    %1 = vector.load %arg2[%c0_2, %c0_3] : memref<128x4xf32, #tpu.memory_space<vmem>>, vector<128x4xf32>
    %c0_4 = arith.constant 0 : index
    %c0_5 = arith.constant 0 : index
    %2 = vector.load %arg3[%c0_4, %c0_5] : memref<128x1xf32, #tpu.memory_space<vmem>>, vector<128x1xf32>
    %3 = vector.extract_strided_slice %1 {offsets = [0, 0], sizes = [128, 1], strides = [1, 1]} : vector<128x4xf32> to vector<128x1xf32>
    %4 = vector.shape_cast %3 : vector<128x1xf32> to vector<1x128x1xf32>
    %5 = vector.extract_strided_slice %0 {offsets = [0, 0, 0], sizes = [2, 1, 256], strides = [1, 1, 1]} : vector<2x4x256xf32> to vector<2x1x256xf32>
    %6 = vector.broadcast %4 : vector<1x128x1xf32> to vector<2x128x256xf32>
    %7 = vector.broadcast %5 : vector<2x1x256xf32> to vector<2x128x256xf32>
    %8 = arith.mulf %6, %7 : vector<2x128x256xf32>
    %9 = vector.extract_strided_slice %1 {offsets = [0, 1], sizes = [128, 1], strides = [1, 1]} : vector<128x4xf32> to vector<128x1xf32>
    %10 = vector.shape_cast %9 : vector<128x1xf32> to vector<1x128x1xf32>
    %11 = vector.extract_strided_slice %0 {offsets = [0, 1, 0], sizes = [2, 1, 256], strides = [1, 1, 1]} : vector<2x4x256xf32> to vector<2x1x256xf32>
    %12 = vector.broadcast %10 : vector<1x128x1xf32> to vector<2x128x256xf32>
    %13 = vector.broadcast %11 : vector<2x1x256xf32> to vector<2x128x256xf32>
    %14 = arith.mulf %12, %13 : vector<2x128x256xf32>
    %15 = arith.addf %8, %14 : vector<2x128x256xf32>
    %16 = vector.extract_strided_slice %1 {offsets = [0, 2], sizes = [128, 1], strides = [1, 1]} : vector<128x4xf32> to vector<128x1xf32>
    %17 = vector.shape_cast %16 : vector<128x1xf32> to vector<1x128x1xf32>
    %18 = vector.extract_strided_slice %0 {offsets = [0, 2, 0], sizes = [2, 1, 256], strides = [1, 1, 1]} : vector<2x4x256xf32> to vector<2x1x256xf32>
    %19 = vector.broadcast %17 : vector<1x128x1xf32> to vector<2x128x256xf32>
    %20 = vector.broadcast %18 : vector<2x1x256xf32> to vector<2x128x256xf32>
    %21 = arith.mulf %19, %20 : vector<2x128x256xf32>
    %22 = arith.addf %15, %21 : vector<2x128x256xf32>
    %23 = vector.extract_strided_slice %1 {offsets = [0, 3], sizes = [128, 1], strides = [1, 1]} : vector<128x4xf32> to vector<128x1xf32>
    %24 = vector.shape_cast %23 : vector<128x1xf32> to vector<1x128x1xf32>
    %25 = vector.extract_strided_slice %0 {offsets = [0, 3, 0], sizes = [2, 1, 256], strides = [1, 1, 1]} : vector<2x4x256xf32> to vector<2x1x256xf32>
    %26 = vector.broadcast %24 : vector<1x128x1xf32> to vector<2x128x256xf32>
    %27 = vector.broadcast %25 : vector<2x1x256xf32> to vector<2x128x256xf32>
    %28 = arith.mulf %26, %27 : vector<2x128x256xf32>
    %29 = arith.addf %22, %28 : vector<2x128x256xf32>
    %30 = vector.shape_cast %2 : vector<128x1xf32> to vector<1x128x1xf32>
    %31 = vector.broadcast %30 : vector<1x128x1xf32> to vector<2x128x256xf32>
    %32 = arith.addf %29, %31 : vector<2x128x256xf32>
    %cst = arith.constant 0.000000e+00 : f32
    %33 = vector.broadcast %cst : f32 to vector<2x128x256xf32>
    %34 = arith.maximumf %32, %33 : vector<2x128x256xf32>
    %cst_6 = arith.constant dense<0.000000e+00> : vector<2x128xf32>
    %35 = vector.multi_reduction <add>, %34, %cst_6 [2] : vector<2x128x256xf32> to vector<2x128xf32>
    %cst_7 = arith.constant 3.906250e-03 : f32
    %36 = vector.broadcast %cst_7 : f32 to vector<2x128xf32>
    %37 = arith.mulf %35, %36 : vector<2x128xf32>
    %c0_8 = arith.constant 0 : index
    %c0_9 = arith.constant 0 : index
    %38 = vector.load %arg4[%c0_8, %c0_9] : memref<2x128xf32, #tpu.memory_space<vmem>>, vector<2x128xf32>
    tpu.vector_store %arg4[%c0_8, %c0_9], %37 {strides = array<i32>} : memref<2x128xf32, #tpu.memory_space<vmem>>, vector<2x128xf32>,
    return
  }
  func.func @transform_0(%arg0: i32) -> (i32, i32, i32) {
    %c0_i32 = arith.constant 0 : i32
    %c0_i32_0 = arith.constant 0 : i32
    %c0_i32_1 = arith.constant 0 : i32
    return %arg0, %c0_i32, %c0_i32_0 : i32, i32, i32
  }
  func.func @transform_1(%arg0: i32) -> (i32, i32) {
    %c0_i32 = arith.constant 0 : i32
    %c0_i32_0 = arith.constant 0 : i32
    %c0_i32_1 = arith.constant 0 : i32
    return %c0_i32, %c0_i32_0 : i32, i32
  }
  func.func @transform_2(%arg0: i32) -> (i32, i32) {
    %c0_i32 = arith.constant 0 : i32
    %c0_i32_0 = arith.constant 0 : i32
    %c0_i32_1 = arith.constant 0 : i32
    return %c0_i32, %c0_i32_0 : i32, i32
  }
  func.func @transform_3(%arg0: i32) -> (i32, i32) {
    %c0_i32 = arith.constant 0 : i32
    %c0_i32_0 = arith.constant 0 : i32
    return %arg0, %c0_i32 : i32, i32
  }
}

</mosaic_0001>

<llo_original>
// kernel: tpu_custom_call.1
$region0: #{tpu_custom_call.1}
  #allocation0 [shape = 'u32[]', space=smem, size = 0x4, offset = 0x4, fixed_abs, tag = 'smem constant byte address 0x4 - core index']
  #allocation1 [shape = 'u32[144,128]{1,0:T(1,128)}', space=vmem, size = 0x12000, scoped, tag = 'internal scratch']
  %s0 = inlined_call_operand.vmem [shape: f32[2,4,256], index: 0, kind: input, shape index: {}]
  %s1 = inlined_call_operand.vmem [shape: f32[128,4], index: 1, kind: input, shape index: {}]
  %s2 = inlined_call_operand.vmem [shape: f32[128,1], index: 2, kind: input, shape index: {}]
  %s3 = inlined_call_operand.hbm [shape: f32[2,128], index: 3, kind: output, shape index: {}]
  %s4 = sld [smem:[#allocation0]]
  $region22: #{tpu_custom_call.1} parent=0
    _
  %s6 = ssub.s32 1, %s4
  %s7 = scalar_select 0, %s6, %s4
  $region1: #{tpu_custom_call.1} parent=0
    #allocation2 [shape = 'u8[1024]{0}', space=vmem, size = 0x400, scoped, tag = 'output window, operand 0, single buffered']
    #allocation3 [shape = 's32[1]{0}', space=sflag, size = 0x4, scoped, tag = 'scoped memory for tpu_custom_call.1']
    %8 = vsyncpa [#allocation3], 0
    // Predicated region
    $region2: #{tpu_custom_call.1} parent=1 // pred_check
      _
    $region3: #{tpu_custom_call.1} parent=1 // pred_check_branch
      %10 = sbr.rel (0) target = $region5
    $region4: #{tpu_custom_call.1} parent=1 // pred_region
      _
    $region5: #{tpu_custom_call.1} parent=1 // pred_fallthru
      _
    // Predicated region
    $region6: #{tpu_custom_call.1} parent=1 // pred_check
      _
    $region7: #{tpu_custom_call.1} parent=1 // pred_check_branch
      %12 = sbr.rel (0) target = $region9
    $region8: #{tpu_custom_call.1} parent=1 // pred_region
      _
    $region9: #{tpu_custom_call.1} parent=1 // pred_fallthru
      _
    // Predicated region
    $region10: #{tpu_custom_call.1} parent=1 // pred_check
      _
    $region11: #{tpu_custom_call.1} parent=1 // pred_check_branch
      %14 = sbr.rel (0) target = $region13
    $region12: #{tpu_custom_call.1} parent=1 // pred_region
      _
    $region13: #{tpu_custom_call.1} parent=1 // pred_fallthru
      _
    %v15 = vld [vmem:[%s0] sm:$0xff]
    %v16 = vld [vmem:[%s0 + $0x8] sm:$0xff]
    %v17 = vld [vmem:[%s1] sm:$0xff]
    %v18 = vld [vmem:[%s1 + $0x8] sm:$0xff]
    %v19 = vld [vmem:[%s1 + $0x10] sm:$0xff]
    %v20 = vld [vmem:[%s1 + $0x18] sm:$0xff]
    %v21 = vld [vmem:[%s1 + $0x20] sm:$0xff]
    %v22 = vld [vmem:[%s1 + $0x28] sm:$0xff]
    %v23 = vld [vmem:[%s1 + $0x30] sm:$0xff]
    %v24 = vld [vmem:[%s1 + $0x38] sm:$0xff]
    %v25 = vld [vmem:[%s1 + $0x40] sm:$0xff]
    %v26 = vld [vmem:[%s1 + $0x48] sm:$0xff]
    %v27 = vld [vmem:[%s1 + $0x50] sm:$0xff]
    %v28 = vld [vmem:[%s1 + $0x58] sm:$0xff]
    %v29 = vld [vmem:[%s1 + $0x60] sm:$0xff]
    %v30 = vld [vmem:[%s1 + $0x68] sm:$0xff]
    %v31 = vld [vmem:[%s1 + $0x70] sm:$0xff]
    %v32 = vld [vmem:[%s1 + $0x78] sm:$0xff]
    %v33 = vld [vmem:[%s2] sm:$0xff]
    %v34 = vld [vmem:[%s2 + $0x8] sm:$0xff]
    %v35 = vld [vmem:[%s2 + $0x10] sm:$0xff]
    %v36 = vld [vmem:[%s2 + $0x18] sm:$0xff]
    %v37 = vld [vmem:[%s2 + $0x20] sm:$0xff]
    %v38 = vld [vmem:[%s2 + $0x28] sm:$0xff]
    %v39 = vld [vmem:[%s2 + $0x30] sm:$0xff]
    %v40 = vld [vmem:[%s2 + $0x38] sm:$0xff]
    %v41 = vld [vmem:[%s2 + $0x40] sm:$0xff]
    %v42 = vld [vmem:[%s2 + $0x48] sm:$0xff]
    %v43 = vld [vmem:[%s2 + $0x50] sm:$0xff]
    %v44 = vld [vmem:[%s2 + $0x58] sm:$0xff]
    %v45 = vld [vmem:[%s2 + $0x60] sm:$0xff]
    %v46 = vld [vmem:[%s2 + $0x68] sm:$0xff]
    %v47 = vld [vmem:[%s2 + $0x70] sm:$0xff]
    %v48 = vld [vmem:[%s2 + $0x78] sm:$0xff]
    %50 = vset.pattern.permute.xlu0 0
    %51 = vperm.xlu0 %50, %v17
    %v52 = vpop.permute.xlu0 %51
    %55 = vset.pattern.permute.xlu0 0
    %56 = vperm.xlu0 %55, %v18
    %v57 = vpop.permute.xlu0 %56
    %60 = vset.pattern.permute.xlu0 0
    %61 = vperm.xlu0 %60, %v19
    %v62 = vpop.permute.xlu0 %61
    %65 = vset.pattern.permute.xlu0 0
    %66 = vperm.xlu0 %65, %v20
    %v67 = vpop.permute.xlu0 %66
    %70 = vset.pattern.permute.xlu0 0
    %71 = vperm.xlu0 %70, %v21
    %v72 = vpop.permute.xlu0 %71
    %75 = vset.pattern.permute.xlu0 0
    %76 = vperm.xlu0 %75, %v22
    %v77 = vpop.permute.xlu0 %76
    %80 = vset.pattern.permute.xlu0 0
    %81 = vperm.xlu0 %80, %v23
    %v82 = vpop.permute.xlu0 %81
    %85 = vset.pattern.permute.xlu0 0
    %86 = vperm.xlu0 %85, %v24
    %v87 = vpop.permute.xlu0 %86
    %90 = vset.pattern.permute.xlu0 0
    %91 = vperm.xlu0 %90, %v25
    %v92 = vpop.permute.xlu0 %91
    %95 = vset.pattern.permute.xlu0 0
    %96 = vperm.xlu0 %95, %v26
    %v97 = vpop.permute.xlu0 %96
    %100 = vset.pattern.permute.xlu0 0
    %101 = vperm.xlu0 %100, %v27
    %v102 = vpop.permute.xlu0 %101
    %105 = vset.pattern.permute.xlu0 0
    %106 = vperm.xlu0 %105, %v28
    %v107 = vpop.permute.xlu0 %106
    %110 = vset.pattern.permute.xlu0 0
    %111 = vperm.xlu0 %110, %v29
    %v112 = vpop.permute.xlu0 %111
    %115 = vset.pattern.permute.xlu0 0
    %116 = vperm.xlu0 %115, %v30
    %v117 = vpop.permute.xlu0 %116
    %120 = vset.pattern.permute.xlu0 0
    %121 = vperm.xlu0 %120, %v31
    %v122 = vpop.permute.xlu0 %121
    %125 = vset.pattern.permute.xlu0 0
    %126 = vperm.xlu0 %125, %v32
    %v127 = vpop.permute.xlu0 %126
    %v131 = vlaneseq
    %v132 = vshrl.u32 %v131, 7
    %v133 = vsub.s32 0, %v132
    %v134 = vrot.slane %v15, %v133
    %v135 = vlaneseq
    %v136 = vshrl.u32 %v135, 7
    %v137 = vsub.s32 4, %v136
    %v138 = vrot.slane %v15, %v137
    %v139 = vlaneseq
    %v140 = vshrl.u32 %v139, 7
    %v141 = vsub.s32 0, %v140
    %v142 = vrot.slane %v16, %v141
    %v143 = vlaneseq
    %v144 = vshrl.u32 %v143, 7
    %v145 = vsub.s32 4, %v144
    %v146 = vrot.slane %v16, %v145
    %v151 = vlaneseq
    %v152 = vshrl.u32 %v151, 7
    %v153 = vsub.s32 0, %v152
    %v154 = vrot.slane %v134, %v153
    %v155 = vlaneseq
    %v156 = vshrl.u32 %v155, 7
    %v157 = vsub.s32 0, %v156
    %v158 = vrot.slane %v138, %v157
    %v159 = vlaneseq
    %v160 = vshrl.u32 %v159, 7
    %v161 = vsub.s32 0, %v160
    %v162 = vrot.slane %v142, %v161
    %v163 = vlaneseq
    %v164 = vshrl.u32 %v163, 7
    %v165 = vsub.s32 0, %v164
    %v166 = vrot.slane %v146, %v165
    %v167 = vmul.f32 %v52, %v154
    %v168 = vmul.f32 %v52, %v158
    %v169 = vmul.f32 %v57, %v154
    %v170 = vmul.f32 %v57, %v158
    %v171 = vmul.f32 %v62, %v154
    %v172 = vmul.f32 %v62, %v158
    %v173 = vmul.f32 %v67, %v154
    %v174 = vmul.f32 %v67, %v158
    %v175 = vmul.f32 %v72, %v154
    %v176 = vmul.f32 %v72, %v158
    %v177 = vmul.f32 %v77, %v154
    %v178 = vmul.f32 %v77, %v158
    %v179 = vmul.f32 %v82, %v154
    %v180 = vmul.f32 %v82, %v158
    %v181 = vmul.f32 %v87, %v154
    %v182 = vmul.f32 %v87, %v158
    %v183 = vmul.f32 %v92, %v154
    %v184 = vmul.f32 %v92, %v158
    %v185 = vmul.f32 %v97, %v154
    %v186 = vmul.f32 %v97, %v158
    %v187 = vmul.f32 %v102, %v154
    %v188 = vmul.f32 %v102, %v158
    %v189 = vmul.f32 %v107, %v154
    %v190 = vmul.f32 %v107, %v158
    %v191 = vmul.f32 %v112, %v154
    %v192 = vmul.f32 %v112, %v158
    %v193 = vmul.f32 %v117, %v154
    %v194 = vmul.f32 %v117, %v158
    %v195 = vmul.f32 %v122, %v154
    %v196 = vmul.f32 %v122, %v158
    %v197 = vmul.f32 %v127, %v154
    %v198 = vmul.f32 %v127, %v158
    %v199 = vmul.f32 %v52, %v162
    %v200 = vmul.f32 %v52, %v166
    %v201 = vmul.f32 %v57, %v162
    %v202 = vmul.f32 %v57, %v166
    %v203 = vmul.f32 %v62, %v162
    %v204 = vmul.f32 %v62, %v166
    %v205 = vmul.f32 %v67, %v162
    %v206 = vmul.f32 %v67, %v166
    %v207 = vmul.f32 %v72, %v162
    %v208 = vmul.f32 %v72, %v166
    %v209 = vmul.f32 %v77, %v162
    %v210 = vmul.f32 %v77, %v166
    %v211 = vmul.f32 %v82, %v162
    %v212 = vmul.f32 %v82, %v166
    %v213 = vmul.f32 %v87, %v162
    %v214 = vmul.f32 %v87, %v166
    %v215 = vmul.f32 %v92, %v162
    %v216 = vmul.f32 %v92, %v166
    %v217 = vmul.f32 %v97, %v162
    %v218 = vmul.f32 %v97, %v166
    %v219 = vmul.f32 %v102, %v162
    %v220 = vmul.f32 %v102, %v166
    %v221 = vmul.f32 %v107, %v162
    %v222 = vmul.f32 %v107, %v166
    %v223 = vmul.f32 %v112, %v162
    %v224 = vmul.f32 %v112, %v166
    %v225 = vmul.f32 %v117, %v162
    %v226 = vmul.f32 %v117, %v166
    %v227 = vmul.f32 %v122, %v162
    %v228 = vmul.f32 %v122, %v166
    %v229 = vmul.f32 %v127, %v162
    %v230 = vmul.f32 %v127, %v166
    %231 = vset.pattern.permute.xlu0 1
    %232 = vperm.xlu0 %231, %v17
    %v233 = vpop.permute.xlu0 %232
    %235 = vset.pattern.permute.xlu0 1
    %236 = vperm.xlu0 %235, %v18
    %v237 = vpop.permute.xlu0 %236
    %239 = vset.pattern.permute.xlu0 1
    %240 = vperm.xlu0 %239, %v19
    %v241 = vpop.permute.xlu0 %240
    %243 = vset.pattern.permute.xlu0 1
    %244 = vperm.xlu0 %243, %v20
    %v245 = vpop.permute.xlu0 %244
    %247 = vset.pattern.permute.xlu0 1
    %248 = vperm.xlu0 %247, %v21
    %v249 = vpop.permute.xlu0 %248
    %251 = vset.pattern.permute.xlu0 1
    %252 = vperm.xlu0 %251, %v22
    %v253 = vpop.permute.xlu0 %252
    %255 = vset.pattern.permute.xlu0 1
    %256 = vperm.xlu0 %255, %v23
    %v257 = vpop.permute.xlu0 %256
    %259 = vset.pattern.permute.xlu0 1
    %260 = vperm.xlu0 %259, %v24
    %v261 = vpop.permute.xlu0 %260
    %263 = vset.pattern.permute.xlu0 1
    %264 = vperm.xlu0 %263, %v25
    %v265 = vpop.permute.xlu0 %264
    %267 = vset.pattern.permute.xlu0 1
    %268 = vperm.xlu0 %267, %v26
    %v269 = vpop.permute.xlu0 %268
    %271 = vset.pattern.permute.xlu0 1
    %272 = vperm.xlu0 %271, %v27
    %v273 = vpop.permute.xlu0 %272
    %275 = vset.pattern.permute.xlu0 1
    %276 = vperm.xlu0 %275, %v28
    %v277 = vpop.permute.xlu0 %276
    %279 = vset.pattern.permute.xlu0 1
    %280 = vperm.xlu0 %279, %v29
    %v281 = vpop.permute.xlu0 %280
    %283 = vset.pattern.permute.xlu0 1
    %284 = vperm.xlu0 %283, %v30
    %v285 = vpop.permute.xlu0 %284
    %287 = vset.pattern.permute.xlu0 1
    %288 = vperm.xlu0 %287, %v31
    %v289 = vpop.permute.xlu0 %288
    %291 = vset.pattern.permute.xlu0 1
    %292 = vperm.xlu0 %291, %v32
    %v293 = vpop.permute.xlu0 %292
    %v295 = vlaneseq
    %v296 = vshrl.u32 %v295, 7
    %v297 = vsub.s32 1, %v296
    %v298 = vrot.slane %v15, %v297
    %v299 = vlaneseq
    %v300 = vshrl.u32 %v299, 7
    %v301 = vsub.s32 5, %v300
    %v302 = vrot.slane %v15, %v301
    %v303 = vlaneseq
    %v304 = vshrl.u32 %v303, 7
    %v305 = vsub.s32 1, %v304
    %v306 = vrot.slane %v16, %v305
    %v307 = vlaneseq
    %v308 = vshrl.u32 %v307, 7
    %v309 = vsub.s32 5, %v308
    %v310 = vrot.slane %v16, %v309
    %v315 = vlaneseq
    %v316 = vshrl.u32 %v315, 7
    %v317 = vsub.s32 1, %v316
    %v318 = vrot.slane %v298, %v317
    %v319 = vlaneseq
    %v320 = vshrl.u32 %v319, 7
    %v321 = vsub.s32 1, %v320
    %v322 = vrot.slane %v302, %v321
    %v323 = vlaneseq
    %v324 = vshrl.u32 %v323, 7
    %v325 = vsub.s32 1, %v324
    %v326 = vrot.slane %v306, %v325
    %v327 = vlaneseq
    %v328 = vshrl.u32 %v327, 7
    %v329 = vsub.s32 1, %v328
    %v330 = vrot.slane %v310, %v329
    %v331 = vmul.f32 %v233, %v318
    %v332 = vmul.f32 %v233, %v322
    %v333 = vmul.f32 %v237, %v318
    %v334 = vmul.f32 %v237, %v322
    %v335 = vmul.f32 %v241, %v318
    %v336 = vmul.f32 %v241, %v322
    %v337 = vmul.f32 %v245, %v318
    %v338 = vmul.f32 %v245, %v322
    %v339 = vmul.f32 %v249, %v318
    %v340 = vmul.f32 %v249, %v322
    %v341 = vmul.f32 %v253, %v318
    %v342 = vmul.f32 %v253, %v322
    %v343 = vmul.f32 %v257, %v318
    %v344 = vmul.f32 %v257, %v322
    %v345 = vmul.f32 %v261, %v318
    %v346 = vmul.f32 %v261, %v322
    %v347 = vmul.f32 %v265, %v318
    %v348 = vmul.f32 %v265, %v322
    %v349 = vmul.f32 %v269, %v318
    %v350 = vmul.f32 %v269, %v322
    %v351 = vmul.f32 %v273, %v318
    %v352 = vmul.f32 %v273, %v322
    %v353 = vmul.f32 %v277, %v318
    %v354 = vmul.f32 %v277, %v322
    %v355 = vmul.f32 %v281, %v318
    %v356 = vmul.f32 %v281, %v322
    %v357 = vmul.f32 %v285, %v318
    %v358 = vmul.f32 %v285, %v322
    %v359 = vmul.f32 %v289, %v318
    %v360 = vmul.f32 %v289, %v322
    %v361 = vmul.f32 %v293, %v318
    %v362 = vmul.f32 %v293, %v322
    %v363 = vmul.f32 %v233, %v326
    %v364 = vmul.f32 %v233, %v330
    %v365 = vmul.f32 %v237, %v326
    %v366 = vmul.f32 %v237, %v330
    %v367 = vmul.f32 %v241, %v326
    %v368 = vmul.f32 %v241, %v330
    %v369 = vmul.f32 %v245, %v326
    %v370 = vmul.f32 %v245, %v330
    %v371 = vmul.f32 %v249, %v326
    %v372 = vmul.f32 %v249, %v330
    %v373 = vmul.f32 %v253, %v326
    %v374 = vmul.f32 %v253, %v330
    %v375 = vmul.f32 %v257, %v326
    %v376 = vmul.f32 %v257, %v330
    %v377 = vmul.f32 %v261, %v326
    %v378 = vmul.f32 %v261, %v330
    %v379 = vmul.f32 %v265, %v326
    %v380 = vmul.f32 %v265, %v330
    %v381 = vmul.f32 %v269, %v326
    %v382 = vmul.f32 %v269, %v330
    %v383 = vmul.f32 %v273, %v326
    %v384 = vmul.f32 %v273, %v330
    %v385 = vmul.f32 %v277, %v326
    %v386 = vmul.f32 %v277, %v330
    %v387 = vmul.f32 %v281, %v326
    %v388 = vmul.f32 %v281, %v330
    %v389 = vmul.f32 %v285, %v326
    %v390 = vmul.f32 %v285, %v330
    %v391 = vmul.f32 %v289, %v326
    %v392 = vmul.f32 %v289, %v330
    %v393 = vmul.f32 %v293, %v326
    %v394 = vmul.f32 %v293, %v330
    %v395 = vadd.f32 %v167, %v331
    %v396 = vadd.f32 %v168, %v332
    %v397 = vadd.f32 %v169, %v333
    %v398 = vadd.f32 %v170, %v334
    %v399 = vadd.f32 %v171, %v335
    %v400 = vadd.f32 %v172, %v336
    %v401 = vadd.f32 %v173, %v337
    %v402 = vadd.f32 %v174, %v338
    %v403 = vadd.f32 %v175, %v339
    %v404 = vadd.f32 %v176, %v340
    %v405 = vadd.f32 %v177, %v341
    %v406 = vadd.f32 %v178, %v342
    %v407 = vadd.f32 %v179, %v343
    %v408 = vadd.f32 %v180, %v344
    %v409 = vadd.f32 %v181, %v345
    %v410 = vadd.f32 %v182, %v346
    %v411 = vadd.f32 %v183, %v347
    %v412 = vadd.f32 %v184, %v348
    %v413 = vadd.f32 %v185, %v349
    %v414 = vadd.f32 %v186, %v350
    %v415 = vadd.f32 %v187, %v351
    %v416 = vadd.f32 %v188, %v352
    %v417 = vadd.f32 %v189, %v353
    %v418 = vadd.f32 %v190, %v354
    %v419 = vadd.f32 %v191, %v355
    %v420 = vadd.f32 %v192, %v356
    %v421 = vadd.f32 %v193, %v357
    %v422 = vadd.f32 %v194, %v358
    %v423 = vadd.f32 %v195, %v359
    %v424 = vadd.f32 %v196, %v360
    %v425 = vadd.f32 %v197, %v361
    %v426 = vadd.f32 %v198, %v362
    %v427 = vadd.f32 %v199, %v363
    %v428 = vadd.f32 %v200, %v364
    %v429 = vadd.f32 %v201, %v365
    %v430 = vadd.f32 %v202, %v366
    %v431 = vadd.f32 %v203, %v367
    %v432 = vadd.f32 %v204, %v368
    %v433 = vadd.f32 %v205, %v369
    %v434 = vadd.f32 %v206, %v370
    %v435 = vadd.f32 %v207, %v371
    %v436 = vadd.f32 %v208, %v372
    %v437 = vadd.f32 %v209, %v373
    %v438 = vadd.f32 %v210, %v374
    %v439 = vadd.f32 %v211, %v375
    %v440 = vadd.f32 %v212, %v376
    %v441 = vadd.f32 %v213, %v377
    %v442 = vadd.f32 %v214, %v378
    %v443 = vadd.f32 %v215, %v379
    %v444 = vadd.f32 %v216, %v380
    %v445 = vadd.f32 %v217, %v381
    %v446 = vadd.f32 %v218, %v382
    %v447 = vadd.f32 %v219, %v383
    %v448 = vadd.f32 %v220, %v384
    %v449 = vadd.f32 %v221, %v385
    %v450 = vadd.f32 %v222, %v386
    %v451 = vadd.f32 %v223, %v387
    %v452 = vadd.f32 %v224, %v388
    %v453 = vadd.f32 %v225, %v389
    %v454 = vadd.f32 %v226, %v390
    %v455 = vadd.f32 %v227, %v391
    %v456 = vadd.f32 %v228, %v392
    %v457 = vadd.f32 %v229, %v393
    %v458 = vadd.f32 %v230, %v394
    %459 = vset.pattern.permute.xlu0 2
    %460 = vperm.xlu0 %459, %v17
    %v461 = vpop.permute.xlu0 %460
    %463 = vset.pattern.permute.xlu0 2
    %464 = vperm.xlu0 %463, %v18
    %v465 = vpop.permute.xlu0 %464
    %467 = vset.pattern.permute.xlu0 2
    %468 = vperm.xlu0 %467, %v19
    %v469 = vpop.permute.xlu0 %468
    %471 = vset.pattern.permute.xlu0 2
    %472 = vperm.xlu0 %471, %v20
    %v473 = vpop.permute.xlu0 %472
    %475 = vset.pattern.permute.xlu0 2
    %476 = vperm.xlu0 %475, %v21
    %v477 = vpop.permute.xlu0 %476
    %479 = vset.pattern.permute.xlu0 2
    %480 = vperm.xlu0 %479, %v22
    %v481 = vpop.permute.xlu0 %480
    %483 = vset.pattern.permute.xlu0 2
    %484 = vperm.xlu0 %483, %v23
    %v485 = vpop.permute.xlu0 %484
    %487 = vset.pattern.permute.xlu0 2
    %488 = vperm.xlu0 %487, %v24
    %v489 = vpop.permute.xlu0 %488
    %491 = vset.pattern.permute.xlu0 2
    %492 = vperm.xlu0 %491, %v25
    %v493 = vpop.permute.xlu0 %492
    %495 = vset.pattern.permute.xlu0 2
    %496 = vperm.xlu0 %495, %v26
    %v497 = vpop.permute.xlu0 %496
    %499 = vset.pattern.permute.xlu0 2
    %500 = vperm.xlu0 %499, %v27
    %v501 = vpop.permute.xlu0 %500
    %503 = vset.pattern.permute.xlu0 2
    %504 = vperm.xlu0 %503, %v28
    %v505 = vpop.permute.xlu0 %504
    %507 = vset.pattern.permute.xlu0 2
    %508 = vperm.xlu0 %507, %v29
    %v509 = vpop.permute.xlu0 %508
    %511 = vset.pattern.permute.xlu0 2
    %512 = vperm.xlu0 %511, %v30
    %v513 = vpop.permute.xlu0 %512
    %515 = vset.pattern.permute.xlu0 2
    %516 = vperm.xlu0 %515, %v31
    %v517 = vpop.permute.xlu0 %516
    %519 = vset.pattern.permute.xlu0 2
    %520 = vperm.xlu0 %519, %v32
    %v521 = vpop.permute.xlu0 %520
    %v523 = vlaneseq
    %v524 = vshrl.u32 %v523, 7
    %v525 = vsub.s32 2, %v524
    %v526 = vrot.slane %v15, %v525
    %v527 = vlaneseq
    %v528 = vshrl.u32 %v527, 7
    %v529 = vsub.s32 6, %v528
    %v530 = vrot.slane %v15, %v529
    %v531 = vlaneseq
    %v532 = vshrl.u32 %v531, 7
    %v533 = vsub.s32 2, %v532
    %v534 = vrot.slane %v16, %v533
    %v535 = vlaneseq
    %v536 = vshrl.u32 %v535, 7
    %v537 = vsub.s32 6, %v536
    %v538 = vrot.slane %v16, %v537
    %v543 = vlaneseq
    %v544 = vshrl.u32 %v543, 7
    %v545 = vsub.s32 2, %v544
    %v546 = vrot.slane %v526, %v545
    %v547 = vlaneseq
    %v548 = vshrl.u32 %v547, 7
    %v549 = vsub.s32 2, %v548
    %v550 = vrot.slane %v530, %v549
    %v551 = vlaneseq
    %v552 = vshrl.u32 %v551, 7
    %v553 = vsub.s32 2, %v552
    %v554 = vrot.slane %v534, %v553
    %v555 = vlaneseq
    %v556 = vshrl.u32 %v555, 7
    %v557 = vsub.s32 2, %v556
    %v558 = vrot.slane %v538, %v557
    %v559 = vmul.f32 %v461, %v546
    %v560 = vmul.f32 %v461, %v550
    %v561 = vmul.f32 %v465, %v546
    %v562 = vmul.f32 %v465, %v550
    %v563 = vmul.f32 %v469, %v546
    %v564 = vmul.f32 %v469, %v550
    %v565 = vmul.f32 %v473, %v546
    %v566 = vmul.f32 %v473, %v550
    %v567 = vmul.f32 %v477, %v546
    %v568 = vmul.f32 %v477, %v550
    %v569 = vmul.f32 %v481, %v546
    %v570 = vmul.f32 %v481, %v550
    %v571 = vmul.f32 %v485, %v546
    %v572 = vmul.f32 %v485, %v550
    %v573 = vmul.f32 %v489, %v546
    %v574 = vmul.f32 %v489, %v550
    %v575 = vmul.f32 %v493, %v546
    %v576 = vmul.f32 %v493, %v550
    %v577 = vmul.f32 %v497, %v546
    %v578 = vmul.f32 %v497, %v550
    %v579 = vmul.f32 %v501, %v546
    %v580 = vmul.f32 %v501, %v550
    %v581 = vmul.f32 %v505, %v546
    %v582 = vmul.f32 %v505, %v550
    %v583 = vmul.f32 %v509, %v546
    %v584 = vmul.f32 %v509, %v550
    %v585 = vmul.f32 %v513, %v546
    %v586 = vmul.f32 %v513, %v550
    %v587 = vmul.f32 %v517, %v546
    %v588 = vmul.f32 %v517, %v550
    %v589 = vmul.f32 %v521, %v546
    %v590 = vmul.f32 %v521, %v550
    %v591 = vmul.f32 %v461, %v554
    %v592 = vmul.f32 %v461, %v558
    %v593 = vmul.f32 %v465, %v554
    %v594 = vmul.f32 %v465, %v558
    %v595 = vmul.f32 %v469, %v554
    %v596 = vmul.f32 %v469, %v558
    %v597 = vmul.f32 %v473, %v554
    %v598 = vmul.f32 %v473, %v558
    %v599 = vmul.f32 %v477, %v554
    %v600 = vmul.f32 %v477, %v558
    %v601 = vmul.f32 %v481, %v554
    %v602 = vmul.f32 %v481, %v558
    %v603 = vmul.f32 %v485, %v554
    %v604 = vmul.f32 %v485, %v558
    %v605 = vmul.f32 %v489, %v554
    %v606 = vmul.f32 %v489, %v558
    %v607 = vmul.f32 %v493, %v554
    %v608 = vmul.f32 %v493, %v558
    %v609 = vmul.f32 %v497, %v554
    %v610 = vmul.f32 %v497, %v558
    %v611 = vmul.f32 %v501, %v554
    %v612 = vmul.f32 %v501, %v558
    %v613 = vmul.f32 %v505, %v554
    %v614 = vmul.f32 %v505, %v558
    %v615 = vmul.f32 %v509, %v554
    %v616 = vmul.f32 %v509, %v558
    %v617 = vmul.f32 %v513, %v554
    %v618 = vmul.f32 %v513, %v558
    %v619 = vmul.f32 %v517, %v554
    %v620 = vmul.f32 %v517, %v558
    %v621 = vmul.f32 %v521, %v554
    %v622 = vmul.f32 %v521, %v558
    %v623 = vadd.f32 %v395, %v559
    %v624 = vadd.f32 %v396, %v560
    %v625 = vadd.f32 %v397, %v561
    %v626 = vadd.f32 %v398, %v562
    %v627 = vadd.f32 %v399, %v563
    %v628 = vadd.f32 %v400, %v564
    %v629 = vadd.f32 %v401, %v565
    %v630 = vadd.f32 %v402, %v566
    %v631 = vadd.f32 %v403, %v567
    %v632 = vadd.f32 %v404, %v568
    %v633 = vadd.f32 %v405, %v569
    %v634 = vadd.f32 %v406, %v570
    %v635 = vadd.f32 %v407, %v571
    %v636 = vadd.f32 %v408, %v572
    %v637 = vadd.f32 %v409, %v573
    %v638 = vadd.f32 %v410, %v574
    %v639 = vadd.f32 %v411, %v575
    %v640 = vadd.f32 %v412, %v576
    %v641 = vadd.f32 %v413, %v577
    %v642 = vadd.f32 %v414, %v578
    %v643 = vadd.f32 %v415, %v579
    %v644 = vadd.f32 %v416, %v580
    %v645 = vadd.f32 %v417, %v581
    %v646 = vadd.f32 %v418, %v582
    %v647 = vadd.f32 %v419, %v583
    %v648 = vadd.f32 %v420, %v584
    %v649 = vadd.f32 %v421, %v585
    %v650 = vadd.f32 %v422, %v586
    %v651 = vadd.f32 %v423, %v587
    %v652 = vadd.f32 %v424, %v588
    %v653 = vadd.f32 %v425, %v589
    %v654 = vadd.f32 %v426, %v590
    %v655 = vadd.f32 %v427, %v591
    %v656 = vadd.f32 %v428, %v592
    %v657 = vadd.f32 %v429, %v593
    %v658 = vadd.f32 %v430, %v594
    %v659 = vadd.f32 %v431, %v595
    %v660 = vadd.f32 %v432, %v596
    %v661 = vadd.f32 %v433, %v597
    %v662 = vadd.f32 %v434, %v598
    %v663 = vadd.f32 %v435, %v599
    %v664 = vadd.f32 %v436, %v600
    %v665 = vadd.f32 %v437, %v601
    %v666 = vadd.f32 %v438, %v602
    %v667 = vadd.f32 %v439, %v603
    %v668 = vadd.f32 %v440, %v604
    %v669 = vadd.f32 %v441, %v605
    %v670 = vadd.f32 %v442, %v606
    %v671 = vadd.f32 %v443, %v607
    %v672 = vadd.f32 %v444, %v608
    %v673 = vadd.f32 %v445, %v609
    %v674 = vadd.f32 %v446, %v610
    %v675 = vadd.f32 %v447, %v611
    %v676 = vadd.f32 %v448, %v612
    %v677 = vadd.f32 %v449, %v613
    %v678 = vadd.f32 %v450, %v614
    %v679 = vadd.f32 %v451, %v615
    %v680 = vadd.f32 %v452, %v616
    %v681 = vadd.f32 %v453, %v617
    %v682 = vadd.f32 %v454, %v618
    %v683 = vadd.f32 %v455, %v619
    %v684 = vadd.f32 %v456, %v620
    %v685 = vadd.f32 %v457, %v621
    %v686 = vadd.f32 %v458, %v622
    %687 = vset.pattern.permute.xlu0 3
    %688 = vperm.xlu0 %687, %v17
    %v689 = vpop.permute.xlu0 %688
    %691 = vset.pattern.permute.xlu0 3
    %692 = vperm.xlu0 %691, %v18
    %v693 = vpop.permute.xlu0 %692
    %695 = vset.pattern.permute.xlu0 3
    %696 = vperm.xlu0 %695, %v19
    %v697 = vpop.permute.xlu0 %696
    %699 = vset.pattern.permute.xlu0 3
    %700 = vperm.xlu0 %699, %v20
    %v701 = vpop.permute.xlu0 %700
    %703 = vset.pattern.permute.xlu0 3
    %704 = vperm.xlu0 %703, %v21
    %v705 = vpop.permute.xlu0 %704
    %707 = vset.pattern.permute.xlu0 3
    %708 = vperm.xlu0 %707, %v22
    %v709 = vpop.permute.xlu0 %708
    %711 = vset.pattern.permute.xlu0 3
    %712 = vperm.xlu0 %711, %v23
    %v713 = vpop.permute.xlu0 %712
    %715 = vset.pattern.permute.xlu0 3
    %716 = vperm.xlu0 %715, %v24
    %v717 = vpop.permute.xlu0 %716
    %719 = vset.pattern.permute.xlu0 3
    %720 = vperm.xlu0 %719, %v25
    %v721 = vpop.permute.xlu0 %720
    %723 = vset.pattern.permute.xlu0 3
    %724 = vperm.xlu0 %723, %v26
    %v725 = vpop.permute.xlu0 %724
    %727 = vset.pattern.permute.xlu0 3
    %728 = vperm.xlu0 %727, %v27
    %v729 = vpop.permute.xlu0 %728
    %731 = vset.pattern.permute.xlu0 3
    %732 = vperm.xlu0 %731, %v28
    %v733 = vpop.permute.xlu0 %732
    %735 = vset.pattern.permute.xlu0 3
    %736 = vperm.xlu0 %735, %v29
    %v737 = vpop.permute.xlu0 %736
    %739 = vset.pattern.permute.xlu0 3
    %740 = vperm.xlu0 %739, %v30
    %v741 = vpop.permute.xlu0 %740
    %743 = vset.pattern.permute.xlu0 3
    %744 = vperm.xlu0 %743, %v31
    %v745 = vpop.permute.xlu0 %744
    %747 = vset.pattern.permute.xlu0 3
    %748 = vperm.xlu0 %747, %v32
    %v749 = vpop.permute.xlu0 %748
    %v751 = vlaneseq
    %v752 = vshrl.u32 %v751, 7
    %v753 = vsub.s32 3, %v752
    %v754 = vrot.slane %v15, %v753
    %v755 = vlaneseq
    %v756 = vshrl.u32 %v755, 7
    %v757 = vsub.s32 7, %v756
    %v758 = vrot.slane %v15, %v757
    %v759 = vlaneseq
    %v760 = vshrl.u32 %v759, 7
    %v761 = vsub.s32 3, %v760
    %v762 = vrot.slane %v16, %v761
    %v763 = vlaneseq
    %v764 = vshrl.u32 %v763, 7
    %v765 = vsub.s32 7, %v764
    %v766 = vrot.slane %v16, %v765
    %v771 = vlaneseq
    %v772 = vshrl.u32 %v771, 7
    %v773 = vsub.s32 3, %v772
    %v774 = vrot.slane %v754, %v773
    %v775 = vlaneseq
    %v776 = vshrl.u32 %v775, 7
    %v777 = vsub.s32 3, %v776
    %v778 = vrot.slane %v758, %v777
    %v779 = vlaneseq
    %v780 = vshrl.u32 %v779, 7
    %v781 = vsub.s32 3, %v780
    %v782 = vrot.slane %v762, %v781
    %v783 = vlaneseq
    %v784 = vshrl.u32 %v783, 7
    %v785 = vsub.s32 3, %v784
    %v786 = vrot.slane %v766, %v785
    %v787 = vmul.f32 %v689, %v774
    %v788 = vmul.f32 %v689, %v778
    %v789 = vmul.f32 %v693, %v774
    %v790 = vmul.f32 %v693, %v778
    %v791 = vmul.f32 %v697, %v774
    %v792 = vmul.f32 %v697, %v778
    %v793 = vmul.f32 %v701, %v774
    %v794 = vmul.f32 %v701, %v778
    %v795 = vmul.f32 %v705, %v774
    %v796 = vmul.f32 %v705, %v778
    %v797 = vmul.f32 %v709, %v774
    %v798 = vmul.f32 %v709, %v778
    %v799 = vmul.f32 %v713, %v774
    %v800 = vmul.f32 %v713, %v778
    %v801 = vmul.f32 %v717, %v774
    %v802 = vmul.f32 %v717, %v778
    %v803 = vmul.f32 %v721, %v774
    %v804 = vmul.f32 %v721, %v778
    %v805 = vmul.f32 %v725, %v774
    %v806 = vmul.f32 %v725, %v778
    %v807 = vmul.f32 %v729, %v774
    %v808 = vmul.f32 %v729, %v778
    %v809 = vmul.f32 %v733, %v774
    %v810 = vmul.f32 %v733, %v778
    %v811 = vmul.f32 %v737, %v774
    %v812 = vmul.f32 %v737, %v778
    %v813 = vmul.f32 %v741, %v774
    %v814 = vmul.f32 %v741, %v778
    %v815 = vmul.f32 %v745, %v774
    %v816 = vmul.f32 %v745, %v778
    %v817 = vmul.f32 %v749, %v774
    %v818 = vmul.f32 %v749, %v778
    %v819 = vmul.f32 %v689, %v782
    %v820 = vmul.f32 %v689, %v786
    %v821 = vmul.f32 %v693, %v782
    %v822 = vmul.f32 %v693, %v786
    %v823 = vmul.f32 %v697, %v782
    %v824 = vmul.f32 %v697, %v786
    %v825 = vmul.f32 %v701, %v782
    %v826 = vmul.f32 %v701, %v786
    %v827 = vmul.f32 %v705, %v782
    %v828 = vmul.f32 %v705, %v786
    %v829 = vmul.f32 %v709, %v782
    %v830 = vmul.f32 %v709, %v786
    %v831 = vmul.f32 %v713, %v782
    %v832 = vmul.f32 %v713, %v786
    %v833 = vmul.f32 %v717, %v782
    %v834 = vmul.f32 %v717, %v786
    %v835 = vmul.f32 %v721, %v782
    %v836 = vmul.f32 %v721, %v786
    %v837 = vmul.f32 %v725, %v782
    %v838 = vmul.f32 %v725, %v786
    %v839 = vmul.f32 %v729, %v782
    %v840 = vmul.f32 %v729, %v786
    %v841 = vmul.f32 %v733, %v782
    %v842 = vmul.f32 %v733, %v786
    %v843 = vmul.f32 %v737, %v782
    %v844 = vmul.f32 %v737, %v786
    %v845 = vmul.f32 %v741, %v782
    %v846 = vmul.f32 %v741, %v786
    %v847 = vmul.f32 %v745, %v782
    %v848 = vmul.f32 %v745, %v786
    %v849 = vmul.f32 %v749, %v782
    %v850 = vmul.f32 %v749, %v786
    %v851 = vadd.f32 %v623, %v787
    %v852 = vadd.f32 %v624, %v788
    %v853 = vadd.f32 %v625, %v789
    %v854 = vadd.f32 %v626, %v790
    %v855 = vadd.f32 %v627, %v791
    %v856 = vadd.f32 %v628, %v792
    %v857 = vadd.f32 %v629, %v793
    %v858 = vadd.f32 %v630, %v794
    %v859 = vadd.f32 %v631, %v795
    %v860 = vadd.f32 %v632, %v796
    %v861 = vadd.f32 %v633, %v797
    %v862 = vadd.f32 %v634, %v798
    %v863 = vadd.f32 %v635, %v799
    %v864 = vadd.f32 %v636, %v800
    %v865 = vadd.f32 %v637, %v801
    %v866 = vadd.f32 %v638, %v802
    %v867 = vadd.f32 %v639, %v803
    %v868 = vadd.f32 %v640, %v804
    %v869 = vadd.f32 %v641, %v805
    %v870 = vadd.f32 %v642, %v806
    %v871 = vadd.f32 %v643, %v807
    %v872 = vadd.f32 %v644, %v808
    %v873 = vadd.f32 %v645, %v809
    %v874 = vadd.f32 %v646, %v810
    %v875 = vadd.f32 %v647, %v811
    %v876 = vadd.f32 %v648, %v812
    %v877 = vadd.f32 %v649, %v813
    %v878 = vadd.f32 %v650, %v814
    %v879 = vadd.f32 %v651, %v815
    %v880 = vadd.f32 %v652, %v816
    %v881 = vadd.f32 %v653, %v817
    %v882 = vadd.f32 %v654, %v818
    %v883 = vadd.f32 %v655, %v819
    %v884 = vadd.f32 %v656, %v820
    %v885 = vadd.f32 %v657, %v821
    %v886 = vadd.f32 %v658, %v822
    %v887 = vadd.f32 %v659, %v823
    %v888 = vadd.f32 %v660, %v824
    %v889 = vadd.f32 %v661, %v825
    %v890 = vadd.f32 %v662, %v826
    %v891 = vadd.f32 %v663, %v827
    %v892 = vadd.f32 %v664, %v828
    %v893 = vadd.f32 %v665, %v829
    %v894 = vadd.f32 %v666, %v830
    %v895 = vadd.f32 %v667, %v831
    %v896 = vadd.f32 %v668, %v832
    %v897 = vadd.f32 %v669, %v833
    %v898 = vadd.f32 %v670, %v834
    %v899 = vadd.f32 %v671, %v835
    %v900 = vadd.f32 %v672, %v836
    %v901 = vadd.f32 %v673, %v837
    %v902 = vadd.f32 %v674, %v838
    %v903 = vadd.f32 %v675, %v839
    %v904 = vadd.f32 %v676, %v840
    %v905 = vadd.f32 %v677, %v841
    %v906 = vadd.f32 %v678, %v842
    %v907 = vadd.f32 %v679, %v843
    %v908 = vadd.f32 %v680, %v844
    %v909 = vadd.f32 %v681, %v845
    %v910 = vadd.f32 %v682, %v846
    %v911 = vadd.f32 %v683, %v847
    %v912 = vadd.f32 %v684, %v848
    %v913 = vadd.f32 %v685, %v849
    %v914 = vadd.f32 %v686, %v850
    %916 = vset.pattern.permute.xlu0 0
    %917 = vperm.xlu0 %916, %v33
    %v918 = vpop.permute.xlu0 %917
    %921 = vset.pattern.permute.xlu0 0
    %922 = vperm.xlu0 %921, %v34
    %v923 = vpop.permute.xlu0 %922
    %926 = vset.pattern.permute.xlu0 0
    %927 = vperm.xlu0 %926, %v35
    %v928 = vpop.permute.xlu0 %927
    %931 = vset.pattern.permute.xlu0 0
    %932 = vperm.xlu0 %931, %v36
    %v933 = vpop.permute.xlu0 %932
    %936 = vset.pattern.permute.xlu0 0
    %937 = vperm.xlu0 %936, %v37
    %v938 = vpop.permute.xlu0 %937
    %941 = vset.pattern.permute.xlu0 0
    %942 = vperm.xlu0 %941, %v38
    %v943 = vpop.permute.xlu0 %942
    %946 = vset.pattern.permute.xlu0 0
    %947 = vperm.xlu0 %946, %v39
    %v948 = vpop.permute.xlu0 %947
    %951 = vset.pattern.permute.xlu0 0
    %952 = vperm.xlu0 %951, %v40
    %v953 = vpop.permute.xlu0 %952
    %956 = vset.pattern.permute.xlu0 0
    %957 = vperm.xlu0 %956, %v41
    %v958 = vpop.permute.xlu0 %957
    %961 = vset.pattern.permute.xlu0 0
    %962 = vperm.xlu0 %961, %v42
    %v963 = vpop.permute.xlu0 %962
    %966 = vset.pattern.permute.xlu0 0
    %967 = vperm.xlu0 %966, %v43
    %v968 = vpop.permute.xlu0 %967
    %971 = vset.pattern.permute.xlu0 0
    %972 = vperm.xlu0 %971, %v44
    %v973 = vpop.permute.xlu0 %972
    %976 = vset.pattern.permute.xlu0 0
    %977 = vperm.xlu0 %976, %v45
    %v978 = vpop.permute.xlu0 %977
    %981 = vset.pattern.permute.xlu0 0
    %982 = vperm.xlu0 %981, %v46
    %v983 = vpop.permute.xlu0 %982
    %986 = vset.pattern.permute.xlu0 0
    %987 = vperm.xlu0 %986, %v47
    %v988 = vpop.permute.xlu0 %987
    %991 = vset.pattern.permute.xlu0 0
    %992 = vperm.xlu0 %991, %v48
    %v993 = vpop.permute.xlu0 %992
    %v995 = vadd.f32 %v851, %v918
    %v996 = vadd.f32 %v852, %v918
    %v997 = vadd.f32 %v853, %v923
    %v998 = vadd.f32 %v854, %v923
    %v999 = vadd.f32 %v855, %v928
    %v1000 = vadd.f32 %v856, %v928
    %v1001 = vadd.f32 %v857, %v933
    %v1002 = vadd.f32 %v858, %v933
    %v1003 = vadd.f32 %v859, %v938
    %v1004 = vadd.f32 %v860, %v938
    %v1005 = vadd.f32 %v861, %v943
    %v1006 = vadd.f32 %v862, %v943
    %v1007 = vadd.f32 %v863, %v948
    %v1008 = vadd.f32 %v864, %v948
    %v1009 = vadd.f32 %v865, %v953
    %v1010 = vadd.f32 %v866, %v953
    %v1011 = vadd.f32 %v867, %v958
    %v1012 = vadd.f32 %v868, %v958
    %v1013 = vadd.f32 %v869, %v963
    %v1014 = vadd.f32 %v870, %v963
    %v1015 = vadd.f32 %v871, %v968
    %v1016 = vadd.f32 %v872, %v968
    %v1017 = vadd.f32 %v873, %v973
    %v1018 = vadd.f32 %v874, %v973
    %v1019 = vadd.f32 %v875, %v978
    %v1020 = vadd.f32 %v876, %v978
    %v1021 = vadd.f32 %v877, %v983
    %v1022 = vadd.f32 %v878, %v983
    %v1023 = vadd.f32 %v879, %v988
    %v1024 = vadd.f32 %v880, %v988
    %v1025 = vadd.f32 %v881, %v993
    %v1026 = vadd.f32 %v882, %v993
    %v1027 = vadd.f32 %v883, %v918
    %v1028 = vadd.f32 %v884, %v918
    %v1029 = vadd.f32 %v885, %v923
    %v1030 = vadd.f32 %v886, %v923
    %v1031 = vadd.f32 %v887, %v928
    %v1032 = vadd.f32 %v888, %v928
    %v1033 = vadd.f32 %v889, %v933
    %v1034 = vadd.f32 %v890, %v933
    %v1035 = vadd.f32 %v891, %v938
    %v1036 = vadd.f32 %v892, %v938
    %v1037 = vadd.f32 %v893, %v943
    %v1038 = vadd.f32 %v894, %v943
    %v1039 = vadd.f32 %v895, %v948
    %v1040 = vadd.f32 %v896, %v948
    %v1041 = vadd.f32 %v897, %v953
    %v1042 = vadd.f32 %v898, %v953
    %v1043 = vadd.f32 %v899, %v958
    %v1044 = vadd.f32 %v900, %v958
    %v1045 = vadd.f32 %v901, %v963
    %v1046 = vadd.f32 %v902, %v963
    %v1047 = vadd.f32 %v903, %v968
    %v1048 = vadd.f32 %v904, %v968
    %v1049 = vadd.f32 %v905, %v973
    %v1050 = vadd.f32 %v906, %v973
    %v1051 = vadd.f32 %v907, %v978
    %v1052 = vadd.f32 %v908, %v978
    %v1053 = vadd.f32 %v909, %v983
    %v1054 = vadd.f32 %v910, %v983
    %v1055 = vadd.f32 %v911, %v988
    %v1056 = vadd.f32 %v912, %v988
    %v1057 = vadd.f32 %v913, %v993
    %v1058 = vadd.f32 %v914, %v993
    %v1059 = vmax.f32 %v995, 0.0
    %v1060 = vmax.f32 %v996, 0.0
    %v1061 = vmax.f32 %v997, 0.0
    %v1062 = vmax.f32 %v998, 0.0
    %v1063 = vmax.f32 %v999, 0.0
    %v1064 = vmax.f32 %v1000, 0.0
    %v1065 = vmax.f32 %v1001, 0.0
    %v1066 = vmax.f32 %v1002, 0.0
    %v1067 = vmax.f32 %v1003, 0.0
    %v1068 = vmax.f32 %v1004, 0.0
    %v1069 = vmax.f32 %v1005, 0.0
    %v1070 = vmax.f32 %v1006, 0.0
    %v1071 = vmax.f32 %v1007, 0.0
    %v1072 = vmax.f32 %v1008, 0.0
    %v1073 = vmax.f32 %v1009, 0.0
    %v1074 = vmax.f32 %v1010, 0.0
    %v1075 = vmax.f32 %v1011, 0.0
    %v1076 = vmax.f32 %v1012, 0.0
    %v1077 = vmax.f32 %v1013, 0.0
    %v1078 = vmax.f32 %v1014, 0.0
    %v1079 = vmax.f32 %v1015, 0.0
    %v1080 = vmax.f32 %v1016, 0.0
    %v1081 = vmax.f32 %v1017, 0.0
    %v1082 = vmax.f32 %v1018, 0.0
    %v1083 = vmax.f32 %v1019, 0.0
    %v1084 = vmax.f32 %v1020, 0.0
    %v1085 = vmax.f32 %v1021, 0.0
    %v1086 = vmax.f32 %v1022, 0.0
    %v1087 = vmax.f32 %v1023, 0.0
    %v1088 = vmax.f32 %v1024, 0.0
    %v1089 = vmax.f32 %v1025, 0.0
    %v1090 = vmax.f32 %v1026, 0.0
    %v1091 = vmax.f32 %v1027, 0.0
    %v1092 = vmax.f32 %v1028, 0.0
    %v1093 = vmax.f32 %v1029, 0.0
    %v1094 = vmax.f32 %v1030, 0.0
    %v1095 = vmax.f32 %v1031, 0.0
    %v1096 = vmax.f32 %v1032, 0.0
    %v1097 = vmax.f32 %v1033, 0.0
    %v1098 = vmax.f32 %v1034, 0.0
    %v1099 = vmax.f32 %v1035, 0.0
    %v1100 = vmax.f32 %v1036, 0.0
    %v1101 = vmax.f32 %v1037, 0.0
    %v1102 = vmax.f32 %v1038, 0.0
    %v1103 = vmax.f32 %v1039, 0.0
    %v1104 = vmax.f32 %v1040, 0.0
    %v1105 = vmax.f32 %v1041, 0.0
    %v1106 = vmax.f32 %v1042, 0.0
    %v1107 = vmax.f32 %v1043, 0.0
    %v1108 = vmax.f32 %v1044, 0.0
    %v1109 = vmax.f32 %v1045, 0.0
    %v1110 = vmax.f32 %v1046, 0.0
    %v1111 = vmax.f32 %v1047, 0.0
    %v1112 = vmax.f32 %v1048, 0.0
    %v1113 = vmax.f32 %v1049, 0.0
    %v1114 = vmax.f32 %v1050, 0.0
    %v1115 = vmax.f32 %v1051, 0.0
    %v1116 = vmax.f32 %v1052, 0.0
    %v1117 = vmax.f32 %v1053, 0.0
    %v1118 = vmax.f32 %v1054, 0.0
    %v1119 = vmax.f32 %v1055, 0.0
    %v1120 = vmax.f32 %v1056, 0.0
    %v1121 = vmax.f32 %v1057, 0.0
    %v1122 = vmax.f32 %v1058, 0.0
    %v1123 = vadd.f32 %v1059, %v1060
    %1124 = vadd.xlane.f32.xlu0 %v1123
    %v1125 = vpop.xlane.xlu0 %1124
    %v1126 = vadd.f32 %v1061, %v1062
    %1127 = vadd.xlane.f32.xlu0 %v1126
    %v1128 = vpop.xlane.xlu0 %1127
    %v1129 = vadd.f32 %v1063, %v1064
    %1130 = vadd.xlane.f32.xlu0 %v1129
    %v1131 = vpop.xlane.xlu0 %1130
    %v1132 = vadd.f32 %v1065, %v1066
    %1133 = vadd.xlane.f32.xlu0 %v1132
    %v1134 = vpop.xlane.xlu0 %1133
    %v1135 = vadd.f32 %v1067, %v1068
    %1136 = vadd.xlane.f32.xlu0 %v1135
    %v1137 = vpop.xlane.xlu0 %1136
    %v1138 = vadd.f32 %v1069, %v1070
    %1139 = vadd.xlane.f32.xlu0 %v1138
    %v1140 = vpop.xlane.xlu0 %1139
    %v1141 = vadd.f32 %v1071, %v1072
    %1142 = vadd.xlane.f32.xlu0 %v1141
    %v1143 = vpop.xlane.xlu0 %1142
    %v1144 = vadd.f32 %v1073, %v1074
    %1145 = vadd.xlane.f32.xlu0 %v1144
    %v1146 = vpop.xlane.xlu0 %1145
    %v1147 = vadd.f32 %v1075, %v1076
    %1148 = vadd.xlane.f32.xlu0 %v1147
    %v1149 = vpop.xlane.xlu0 %1148
    %v1150 = vadd.f32 %v1077, %v1078
    %1151 = vadd.xlane.f32.xlu0 %v1150
    %v1152 = vpop.xlane.xlu0 %1151
    %v1153 = vadd.f32 %v1079, %v1080
    %1154 = vadd.xlane.f32.xlu0 %v1153
    %v1155 = vpop.xlane.xlu0 %1154
    %v1156 = vadd.f32 %v1081, %v1082
    %1157 = vadd.xlane.f32.xlu0 %v1156
    %v1158 = vpop.xlane.xlu0 %1157
    %v1159 = vadd.f32 %v1083, %v1084
    %1160 = vadd.xlane.f32.xlu0 %v1159
    %v1161 = vpop.xlane.xlu0 %1160
    %v1162 = vadd.f32 %v1085, %v1086
    %1163 = vadd.xlane.f32.xlu0 %v1162
    %v1164 = vpop.xlane.xlu0 %1163
    %v1165 = vadd.f32 %v1087, %v1088
    %1166 = vadd.xlane.f32.xlu0 %v1165
    %v1167 = vpop.xlane.xlu0 %1166
    %v1168 = vadd.f32 %v1089, %v1090
    %1169 = vadd.xlane.f32.xlu0 %v1168
    %v1170 = vpop.xlane.xlu0 %1169
    %v1171 = vadd.f32 %v1091, %v1092
    %1172 = vadd.xlane.f32.xlu0 %v1171
    %v1173 = vpop.xlane.xlu0 %1172
    %v1174 = vadd.f32 %v1093, %v1094
    %1175 = vadd.xlane.f32.xlu0 %v1174
    %v1176 = vpop.xlane.xlu0 %1175
    %v1177 = vadd.f32 %v1095, %v1096
    %1178 = vadd.xlane.f32.xlu0 %v1177
    %v1179 = vpop.xlane.xlu0 %1178
    %v1180 = vadd.f32 %v1097, %v1098
    %1181 = vadd.xlane.f32.xlu0 %v1180
    %v1182 = vpop.xlane.xlu0 %1181
    %v1183 = vadd.f32 %v1099, %v1100
    %1184 = vadd.xlane.f32.xlu0 %v1183
    %v1185 = vpop.xlane.xlu0 %1184
    %v1186 = vadd.f32 %v1101, %v1102
    %1187 = vadd.xlane.f32.xlu0 %v1186
    %v1188 = vpop.xlane.xlu0 %1187
    %v1189 = vadd.f32 %v1103, %v1104
    %1190 = vadd.xlane.f32.xlu0 %v1189
    %v1191 = vpop.xlane.xlu0 %1190
    %v1192 = vadd.f32 %v1105, %v1106
    %1193 = vadd.xlane.f32.xlu0 %v1192
    %v1194 = vpop.xlane.xlu0 %1193
    %v1195 = vadd.f32 %v1107, %v1108
    %1196 = vadd.xlane.f32.xlu0 %v1195
    %v1197 = vpop.xlane.xlu0 %1196
    %v1198 = vadd.f32 %v1109, %v1110
    %1199 = vadd.xlane.f32.xlu0 %v1198
    %v1200 = vpop.xlane.xlu0 %1199
    %v1201 = vadd.f32 %v1111, %v1112
    %1202 = vadd.xlane.f32.xlu0 %v1201
    %v1203 = vpop.xlane.xlu0 %1202
    %v1204 = vadd.f32 %v1113, %v1114
    %1205 = vadd.xlane.f32.xlu0 %v1204
    %v1206 = vpop.xlane.xlu0 %1205
    %v1207 = vadd.f32 %v1115, %v1116
    %1208 = vadd.xlane.f32.xlu0 %v1207
    %v1209 = vpop.xlane.xlu0 %1208
    %v1210 = vadd.f32 %v1117, %v1118
    %1211 = vadd.xlane.f32.xlu0 %v1210
    %v1212 = vpop.xlane.xlu0 %1211
    %v1213 = vadd.f32 %v1119, %v1120
    %1214 = vadd.xlane.f32.xlu0 %v1213
    %v1215 = vpop.xlane.xlu0 %1214
    %v1216 = vadd.f32 %v1121, %v1122
    %1217 = vadd.xlane.f32.xlu0 %v1216
    %v1218 = vpop.xlane.xlu0 %1217
    %v1219 = vmul.f32 %v1125, 0.00390625
    %v1220 = vmul.f32 %v1128, 0.00390625
    %v1221 = vmul.f32 %v1131, 0.00390625
    %v1222 = vmul.f32 %v1134, 0.00390625
    %v1223 = vmul.f32 %v1137, 0.00390625
    %v1224 = vmul.f32 %v1140, 0.00390625
    %v1225 = vmul.f32 %v1143, 0.00390625
    %v1226 = vmul.f32 %v1146, 0.00390625
    %v1227 = vmul.f32 %v1149, 0.00390625
    %v1228 = vmul.f32 %v1152, 0.00390625
    %v1229 = vmul.f32 %v1155, 0.00390625
    %v1230 = vmul.f32 %v1158, 0.00390625
    %v1231 = vmul.f32 %v1161, 0.00390625
    %v1232 = vmul.f32 %v1164, 0.00390625
    %v1233 = vmul.f32 %v1167, 0.00390625
    %v1234 = vmul.f32 %v1170, 0.00390625
    %v1235 = vmul.f32 %v1173, 0.00390625
    %v1236 = vmul.f32 %v1176, 0.00390625
    %v1237 = vmul.f32 %v1179, 0.00390625
    %v1238 = vmul.f32 %v1182, 0.00390625
    %v1239 = vmul.f32 %v1185, 0.00390625
    %v1240 = vmul.f32 %v1188, 0.00390625
    %v1241 = vmul.f32 %v1191, 0.00390625
    %v1242 = vmul.f32 %v1194, 0.00390625
    %v1243 = vmul.f32 %v1197, 0.00390625
    %v1244 = vmul.f32 %v1200, 0.00390625
    %v1245 = vmul.f32 %v1203, 0.00390625
    %v1246 = vmul.f32 %v1206, 0.00390625
    %v1247 = vmul.f32 %v1209, 0.00390625
    %v1248 = vmul.f32 %v1212, 0.00390625
    %v1249 = vmul.f32 %v1215, 0.00390625
    %v1250 = vmul.f32 %v1218, 0.00390625
    %v1283 = vlaneseq
    %v1284 = vand.u32 %v1283, 127
    %v1285 = vlaneseq
    %v1286 = vshrl.u32 %v1285, 7
    %v1287 = vsub.s32 %v1284, %v1286
    %v1288 = vrot.slane %v1219, %v1287
    %v1289 = vadd.s32 %v1284, 4294967288
    %v1290 = vlaneseq
    %v1291 = vshrl.u32 %v1290, 7
    %v1292 = vsub.s32 %v1289, %v1291
    %v1293 = vrot.slane %v1220, %v1292
    %vm1294 = vcmask 130112
    %v1295 = vsel %vm1294, %v1293, %v1288
    %v1296 = vadd.s32 %v1284, 4294967280
    %v1297 = vlaneseq
    %v1298 = vshrl.u32 %v1297, 7
    %v1299 = vsub.s32 %v1296, %v1298
    %v1300 = vrot.slane %v1221, %v1299
    %vm1301 = vcmask 195712
    %v1302 = vsel %vm1301, %v1300, %v1295
    %v1303 = vadd.s32 %v1284, 4294967272
    %v1304 = vlaneseq
    %v1305 = vshrl.u32 %v1304, 7
    %v1306 = vsub.s32 %v1303, %v1305
    %v1307 = vrot.slane %v1222, %v1306
    %vm1308 = vcmask 261312
    %v1309 = vsel %vm1308, %v1307, %v1302
    %v1310 = vadd.s32 %v1284, 4294967264
    %v1311 = vlaneseq
    %v1312 = vshrl.u32 %v1311, 7
    %v1313 = vsub.s32 %v1310, %v1312
    %v1314 = vrot.slane %v1223, %v1313
    %vm1315 = vcmask 326912
    %v1316 = vsel %vm1315, %v1314, %v1309
    %v1317 = vadd.s32 %v1284, 4294967256
    %v1318 = vlaneseq
    %v1319 = vshrl.u32 %v1318, 7
    %v1320 = vsub.s32 %v1317, %v1319
    %v1321 = vrot.slane %v1224, %v1320
    %vm1322 = vcmask 392512
    %v1323 = vsel %vm1322, %v1321, %v1316
    %v1324 = vadd.s32 %v1284, 4294967248
    %v1325 = vlaneseq
    %v1326 = vshrl.u32 %v1325, 7
    %v1327 = vsub.s32 %v1324, %v1326
    %v1328 = vrot.slane %v1225, %v1327
    %vm1329 = vcmask 458112
    %v1330 = vsel %vm1329, %v1328, %v1323
    %v1331 = vadd.s32 %v1284, 4294967240
    %v1332 = vlaneseq
    %v1333 = vshrl.u32 %v1332, 7
    %v1334 = vsub.s32 %v1331, %v1333
    %v1335 = vrot.slane %v1226, %v1334
    %vm1336 = vcmask 523712
    %v1337 = vsel %vm1336, %v1335, %v1330
    %v1338 = vadd.s32 %v1284, 4294967232
    %v1339 = vlaneseq
    %v1340 = vshrl.u32 %v1339, 7
    %v1341 = vsub.s32 %v1338, %v1340
    %v1342 = vrot.slane %v1227, %v1341
    %vm1343 = vcmask 589312
    %v1344 = vsel %vm1343, %v1342, %v1337
    %v1345 = vadd.s32 %v1284, 4294967224
    %v1346 = vlaneseq
    %v1347 = vshrl.u32 %v1346, 7
    %v1348 = vsub.s32 %v1345, %v1347
    %v1349 = vrot.slane %v1228, %v1348
    %vm1350 = vcmask 654912
    %v1351 = vsel %vm1350, %v1349, %v1344
    %v1352 = vadd.s32 %v1284, 4294967216
    %v1353 = vlaneseq
    %v1354 = vshrl.u32 %v1353, 7
    %v1355 = vsub.s32 %v1352, %v1354
    %v1356 = vrot.slane %v1229, %v1355
    %vm1357 = vcmask 720512
    %v1358 = vsel %vm1357, %v1356, %v1351
    %v1359 = vadd.s32 %v1284, 4294967208
    %v1360 = vlaneseq
    %v1361 = vshrl.u32 %v1360, 7
    %v1362 = vsub.s32 %v1359, %v1361
    %v1363 = vrot.slane %v1230, %v1362
    %vm1364 = vcmask 786112
    %v1365 = vsel %vm1364, %v1363, %v1358
    %v1366 = vadd.s32 %v1284, 4294967200
    %v1367 = vlaneseq
    %v1368 = vshrl.u32 %v1367, 7
    %v1369 = vsub.s32 %v1366, %v1368
    %v1370 = vrot.slane %v1231, %v1369
    %vm1371 = vcmask 851712
    %v1372 = vsel %vm1371, %v1370, %v1365
    %v1373 = vadd.s32 %v1284, 4294967192
    %v1374 = vlaneseq
    %v1375 = vshrl.u32 %v1374, 7
    %v1376 = vsub.s32 %v1373, %v1375
    %v1377 = vrot.slane %v1232, %v1376
    %vm1378 = vcmask 917312
    %v1379 = vsel %vm1378, %v1377, %v1372
    %v1380 = vadd.s32 %v1284, 4294967184
    %v1381 = vlaneseq
    %v1382 = vshrl.u32 %v1381, 7
    %v1383 = vsub.s32 %v1380, %v1382
    %v1384 = vrot.slane %v1233, %v1383
    %vm1385 = vcmask 982912
    %v1386 = vsel %vm1385, %v1384, %v1379
    %v1387 = vadd.s32 %v1284, 4294967176
    %v1388 = vlaneseq
    %v1389 = vshrl.u32 %v1388, 7
    %v1390 = vsub.s32 %v1387, %v1389
    %v1391 = vrot.slane %v1234, %v1390
    %vm1392 = vcmask 1048512
    %v1393 = vsel %vm1392, %v1391, %v1386
    %v1394 = vlaneseq
    %v1395 = vshrl.u32 %v1394, 7
    %v1396 = vsub.s32 %v1284, %v1395
    %v1397 = vrot.slane %v1235, %v1396
    %v1398 = vlaneseq
    %v1399 = vshrl.u32 %v1398, 7
    %v1400 = vsub.s32 %v1289, %v1399
    %v1401 = vrot.slane %v1236, %v1400
    %v1402 = vsel %vm1294, %v1401, %v1397
    %v1403 = vlaneseq
    %v1404 = vshrl.u32 %v1403, 7
    %v1405 = vsub.s32 %v1296, %v1404
    %v1406 = vrot.slane %v1237, %v1405
    %v1407 = vsel %vm1301, %v1406, %v1402
    %v1408 = vlaneseq
    %v1409 = vshrl.u32 %v1408, 7
    %v1410 = vsub.s32 %v1303, %v1409
    %v1411 = vrot.slane %v1238, %v1410
    %v1412 = vsel %vm1308, %v1411, %v1407
    %v1413 = vlaneseq
    %v1414 = vshrl.u32 %v1413, 7
    %v1415 = vsub.s32 %v1310, %v1414
    %v1416 = vrot.slane %v1239, %v1415
    %v1417 = vsel %vm1315, %v1416, %v1412
    %v1418 = vlaneseq
    %v1419 = vshrl.u32 %v1418, 7
    %v1420 = vsub.s32 %v1317, %v1419
    %v1421 = vrot.slane %v1240, %v1420
    %v1422 = vsel %vm1322, %v1421, %v1417
    %v1423 = vlaneseq
    %v1424 = vshrl.u32 %v1423, 7
    %v1425 = vsub.s32 %v1324, %v1424
    %v1426 = vrot.slane %v1241, %v1425
    %v1427 = vsel %vm1329, %v1426, %v1422
    %v1428 = vlaneseq
    %v1429 = vshrl.u32 %v1428, 7
    %v1430 = vsub.s32 %v1331, %v1429
    %v1431 = vrot.slane %v1242, %v1430
    %v1432 = vsel %vm1336, %v1431, %v1427
    %v1433 = vlaneseq
    %v1434 = vshrl.u32 %v1433, 7
    %v1435 = vsub.s32 %v1338, %v1434
    %v1436 = vrot.slane %v1243, %v1435
    %v1437 = vsel %vm1343, %v1436, %v1432
    %v1438 = vlaneseq
    %v1439 = vshrl.u32 %v1438, 7
    %v1440 = vsub.s32 %v1345, %v1439
    %v1441 = vrot.slane %v1244, %v1440
    %v1442 = vsel %vm1350, %v1441, %v1437
    %v1443 = vlaneseq
    %v1444 = vshrl.u32 %v1443, 7
    %v1445 = vsub.s32 %v1352, %v1444
    %v1446 = vrot.slane %v1245, %v1445
    %v1447 = vsel %vm1357, %v1446, %v1442
    %v1448 = vlaneseq
    %v1449 = vshrl.u32 %v1448, 7
    %v1450 = vsub.s32 %v1359, %v1449
    %v1451 = vrot.slane %v1246, %v1450
    %v1452 = vsel %vm1364, %v1451, %v1447
    %v1453 = vlaneseq
    %v1454 = vshrl.u32 %v1453, 7
    %v1455 = vsub.s32 %v1366, %v1454
    %v1456 = vrot.slane %v1247, %v1455
    %v1457 = vsel %vm1371, %v1456, %v1452
    %v1458 = vlaneseq
    %v1459 = vshrl.u32 %v1458, 7
    %v1460 = vsub.s32 %v1373, %v1459
    %v1461 = vrot.slane %v1248, %v1460
    %v1462 = vsel %vm1378, %v1461, %v1457
    %v1463 = vlaneseq
    %v1464 = vshrl.u32 %v1463, 7
    %v1465 = vsub.s32 %v1380, %v1464
    %v1466 = vrot.slane %v1249, %v1465
    %v1467 = vsel %vm1385, %v1466, %v1462
    %v1468 = vlaneseq
    %v1469 = vshrl.u32 %v1468, 7
    %v1470 = vsub.s32 %v1387, %v1469
    %v1471 = vrot.slane %v1250, %v1470
    %v1472 = vsel %vm1392, %v1471, %v1467
    %vm1473 = vcmask 1041409
    %v1474 = vsel %vm1473, %v1472, %v1393
    %1476 = vst [vmem:[#allocation2] sm:$0x3] %v1474
    // Predicated region
    $region14: #{tpu_custom_call.1} parent=1 // pred_check
      _
    $region15: #{tpu_custom_call.1} parent=1 // pred_check_branch
      %1478 = sbr.rel (0) target = $region17
    $region16: #{tpu_custom_call.1} parent=1 // pred_region
      %s1480 = ssub.s32 32, 32
      %1481 = vsyncadd [#allocation3], %s1480
      %s1483 = sshll.u32 [#allocation2], 4
      %s1484 = int_to_ptr.vmem [resolvable:$true] %s1483
      %1486 = dma.vmem_to_hbm [thread:$0]  %s1484, 32, %s3, [#allocation3]
    $region17: #{tpu_custom_call.1} parent=1 // pred_fallthru
      _
    // Predicated region
    $region18: #{tpu_custom_call.1} parent=1 // pred_check
      _
    $region19: #{tpu_custom_call.1} parent=1 // pred_check_branch
      %1488 = sbr.rel (0) target = $region21
    $region20: #{tpu_custom_call.1} parent=1 // pred_region
      %1489 = dma.done [#allocation3], 32
    $region21: #{tpu_custom_call.1} parent=1 // pred_fallthru
      _
    %1490 = vsyncpa [#allocation3], 1

</llo_original>
